<compile_context>
chip_gen: v7x
topology: tpu7x:2x2x1
jax: 0.10.0
libtpu: 0.0.40
codegen_flags: <defaults>
</compile_context>

<pallas_src>
import jax
import jax.numpy as jnp
from jax.experimental import pallas as pl
from jax.experimental.pallas import tpu as pltpu

_COEFFS = (0.13880908489227295, 0.19925671815872192, 0.18177929520606995)

# Lane-dense layout: last dim is 4*128 lanes (unmasked full-width stores).
_LANES = 512
# 1024 x 512 f32 tile = 2 MiB per buffer; 4 arrays (1 in + 3 out) double
# buffered = 16 MiB live VMEM.  We raise vmem_limit_bytes to 32 MiB so this
# clears v5e's 16 MiB scoped default and stays well inside v7x's 64 MiB VMEM.
_MAX_TILE_ROWS = 1024


def _fused_yolo_kernel(x_ref, y0_ref, y1_ref, y2_ref):
    # Pre-proc: x*255 truncated to the FPGA's uint8 ibuf grid, kept in f32
    # vregs (avoids the sub-32-bit pack/unpack of a real u8 round trip).
    # Exact for inputs in [0, 1); NumPy uint8 wrap-around semantics for
    # out-of-range values are not reproduced.
    qf = jnp.floor(x_ref[...] * 255.0)
    # TODO(synk): FINNExampleOverlay.execute (the opaque FPGA bitstream running
    # the actual YOLO network) has no Pallas equivalent; treated as identity on
    # the quantized buffer, so each head just dequantizes with its coefficient.
    y0_ref[...] = qf * jnp.float32(_COEFFS[0])
    y1_ref[...] = qf * jnp.float32(_COEFFS[1])
    y2_ref[...] = qf * jnp.float32(_COEFFS[2])


def yolo_fpga_forward(x_nchw):
    """Fused pre/post-processing of YoloFPGA.forward (3 heads, NCHW in/out)."""
    n, c, h, w = x_nchw.shape
    total = n * c * h * w

    # Flatten to a lane-dense 2-D slab (rows x 512 lanes).  Typical YOLO
    # shapes (e.g. 3*416*416) are already multiples of 512, so the lane-tail
    # pad / output slice below are normally no-ops.
    rows = pl.cdiv(total, _LANES)
    lane_pad = rows * _LANES - total

    x_flat = x_nchw.reshape(-1)
    if lane_pad:
        x_flat = jnp.pad(x_flat, (0, lane_pad))
    x2d = x_flat.reshape(rows, _LANES)

    # Non-dividing grid: no row padding.  Single full-array block when it
    # fits; otherwise 1024-row tiles with a ragged last block (Pallas pads the
    # read and masks the write — safe for this purely elementwise kernel).
    tile_rows = rows if rows <= _MAX_TILE_ROWS else _MAX_TILE_ROWS
    grid = (pl.cdiv(rows, tile_rows),)

    spec = pl.BlockSpec((tile_rows, _LANES), lambda i: (i, 0))
    out_sds = jax.ShapeDtypeStruct((rows, _LANES), jnp.float32)

    cost = pl.CostEstimate(
        flops=4 * total,                 # 1 quant mul + 3 scale muls per elem
        transcendentals=0,
        bytes_accessed=4 * total * 4,    # 1 f32 in + 3 f32 out
    )

    y0, y1, y2 = pl.pallas_call(
        _fused_yolo_kernel,
        out_shape=(out_sds, out_sds, out_sds),
        grid=grid,
        in_specs=[spec],
        out_specs=(spec, spec, spec),
        compiler_params=pltpu.CompilerParams(
            # Row-tile axis is embarrassingly parallel; lets the grid shard
            # across TensorCores on v7x.  (pltpu.CORE_PARALLEL is the explicit
            # alternative if plain "parallel" is not split across cores.)
            dimension_semantics=("parallel",),
            vmem_limit_bytes=32 << 20,
        ),
        cost_estimate=cost,
    )(x2d)

    outs = []
    for y2d in (y0, y1, y2):
        if lane_pad:
            outs.append(y2d.reshape(-1)[:total].reshape(n, c, h, w))
        else:
            # Free metadata reshape — no extra HBM pass.
            outs.append(y2d.reshape(n, c, h, w))
    return outs


class YoloFPGAPallas:
    """JAX/Pallas port of YoloFPGA.forward (pre/post-processing fused)."""

    def __init__(self, num_heads: int = 3):
        # No learnable parameters: only the fixed per-head scale coefficients.
        self.num_heads = num_heads
        self.coeffs = _COEFFS[:num_heads]

    def __call__(self, x_nchw):
        return yolo_fpga_forward(x_nchw)[: self.num_heads]


if __name__ == "__main__":
    key = jax.random.PRNGKey(0)
    # NCHW RGB image, values in [0, 1) like a normalized input.
    x = jax.random.uniform(key, (2, 3, 16, 16), dtype=jnp.float32)

    model = YoloFPGAPallas()
    outs = model(x)
    outs = [jax.block_until_ready(o) for o in outs]

    # Pure-JAX reference mirroring the PyTorch op sequence (identity FPGA).
    x_nhwc = jnp.transpose(x, (0, 2, 3, 1))
    ibuf = (x_nhwc * 255.0).astype(jnp.uint8)
    for o, coeff in zip(outs, _COEFFS):
        ref = jnp.transpose(ibuf, (0, 3, 1, 2)).astype(jnp.float32) * coeff
        assert o.shape == (2, 3, 16, 16), o.shape
        assert o.dtype == jnp.float32, o.dtype
        assert jnp.allclose(o, ref, atol=1e-6), float(jnp.max(jnp.abs(o - ref)))

    print("KERNEL_OK")
</pallas_src>

<mosaic_0001>
module attributes {stable_mosaic.version = 11 : i64} {
  func.func @_fused_yolo_kernel(%arg0: i32, %arg1: memref<3x512xf32, #tpu.memory_space<vmem>>, %arg2: memref<3x512xf32, #tpu.memory_space<vmem>>, %arg3: memref<3x512xf32, #tpu.memory_space<vmem>>, %arg4: memref<3x512xf32, #tpu.memory_space<vmem>>) attributes {dimension_semantics = [#tpu.dimension_semantics<parallel>], iteration_bounds = array<i64: 1>, scalar_prefetch = 0 : i64, scratch_operands = 0 : i64, tpu.core_type = #tpu.core_type<tc>, window_params = [{transform_indices = @transform_0, window_bounds = array<i64: 3, 512>}, {transform_indices = @transform_1, window_bounds = array<i64: 3, 512>}, {transform_indices = @transform_2, window_bounds = array<i64: 3, 512>}, {transform_indices = @transform_3, window_bounds = array<i64: 3, 512>}]} {
    %c0 = arith.constant 0 : index
    %c0_0 = arith.constant 0 : index
    %0 = vector.load %arg1[%c0, %c0_0] : memref<3x512xf32, #tpu.memory_space<vmem>>, vector<3x512xf32>
    %cst = arith.constant 2.550000e+02 : f32
    %1 = vector.broadcast %cst : f32 to vector<3x512xf32>
    %2 = arith.mulf %0, %1 : vector<3x512xf32>
    %3 = math.floor %2 : vector<3x512xf32>
    %cst_1 = arith.constant 0.138809085 : f32
    %4 = vector.broadcast %cst_1 : f32 to vector<3x512xf32>
    %5 = arith.mulf %3, %4 : vector<3x512xf32>
    %c0_2 = arith.constant 0 : index
    %c0_3 = arith.constant 0 : index
    %6 = vector.load %arg2[%c0_2, %c0_3] : memref<3x512xf32, #tpu.memory_space<vmem>>, vector<3x512xf32>
    tpu.vector_store %arg2[%c0_2, %c0_3], %5 {strides = array<i32>} : memref<3x512xf32, #tpu.memory_space<vmem>>, vector<3x512xf32>,
    %cst_4 = arith.constant 0.199256718 : f32
    %7 = vector.broadcast %cst_4 : f32 to vector<3x512xf32>
    %8 = arith.mulf %3, %7 : vector<3x512xf32>
    %c0_5 = arith.constant 0 : index
    %c0_6 = arith.constant 0 : index
    %9 = vector.load %arg3[%c0_5, %c0_6] : memref<3x512xf32, #tpu.memory_space<vmem>>, vector<3x512xf32>
    tpu.vector_store %arg3[%c0_5, %c0_6], %8 {strides = array<i32>} : memref<3x512xf32, #tpu.memory_space<vmem>>, vector<3x512xf32>,
    %cst_7 = arith.constant 0.181779295 : f32
    %10 = vector.broadcast %cst_7 : f32 to vector<3x512xf32>
    %11 = arith.mulf %3, %10 : vector<3x512xf32>
    %c0_8 = arith.constant 0 : index
    %c0_9 = arith.constant 0 : index
    %12 = vector.load %arg4[%c0_8, %c0_9] : memref<3x512xf32, #tpu.memory_space<vmem>>, vector<3x512xf32>
    tpu.vector_store %arg4[%c0_8, %c0_9], %11 {strides = array<i32>} : memref<3x512xf32, #tpu.memory_space<vmem>>, vector<3x512xf32>,
    return
  }
  func.func @transform_0(%arg0: i32) -> (i32, i32) {
    %c0_i32 = arith.constant 0 : i32
    %c0_i32_0 = arith.constant 0 : i32
    return %arg0, %c0_i32 : i32, i32
  }
  func.func @transform_1(%arg0: i32) -> (i32, i32) {
    %c0_i32 = arith.constant 0 : i32
    %c0_i32_0 = arith.constant 0 : i32
    return %arg0, %c0_i32 : i32, i32
  }
  func.func @transform_2(%arg0: i32) -> (i32, i32) {
    %c0_i32 = arith.constant 0 : i32
    %c0_i32_0 = arith.constant 0 : i32
    return %arg0, %c0_i32 : i32, i32
  }
  func.func @transform_3(%arg0: i32) -> (i32, i32) {
    %c0_i32 = arith.constant 0 : i32
    %c0_i32_0 = arith.constant 0 : i32
    return %arg0, %c0_i32 : i32, i32
  }
}

</mosaic_0001>

<llo_original>
// kernel: tpu_custom_call.1
$region0: #{tpu_custom_call.1}
  #allocation0 [shape = 'u32[]', space=smem, size = 0x4, offset = 0x4, fixed_abs, tag = 'smem constant byte address 0x4 - core index']
  #allocation1 [shape = 'u32[144,128]{1,0:T(1,128)}', space=vmem, size = 0x12000, scoped, tag = 'internal scratch']
  %s0 = inlined_call_operand.hbm [shape: f32[3,512], index: 0, kind: input, shape index: {}]
  %s1 = inlined_call_operand.hbm [shape: f32[3,512], index: 1, kind: output, shape index: {0}]
  %s2 = inlined_call_operand.hbm [shape: f32[3,512], index: 2, kind: output, shape index: {1}]
  %s3 = inlined_call_operand.hbm [shape: f32[3,512], index: 3, kind: output, shape index: {2}]
  %4 = xla_tuple %s1, %s2, %s3
  %s5 = sld [smem:[#allocation0]]
  $region34: #{tpu_custom_call.1} parent=0
    _
  %s7 = ssub.s32 1, %s5
  %s8 = scalar_select 0, %s7, %s5
  $region1: #{tpu_custom_call.1} parent=0
    #allocation2 [shape = 'u8[8192]{0}', space=vmem, size = 0x2000, scoped, tag = 'input window, operand 0, single buffered']
    #allocation3 [shape = 's32[1]{0}', space=sflag, size = 0x4, scoped, tag = 'scoped memory for tpu_custom_call.1']
    #allocation4 [shape = 's32[1]{0}', space=sflag, size = 0x4, scoped, tag = 'scoped memory for tpu_custom_call.1']
    #allocation5 [shape = 'u8[8192]{0}', space=vmem, size = 0x2000, scoped, tag = 'output window, operand 0, single buffered']
    #allocation6 [shape = 'u8[8192]{0}', space=vmem, size = 0x2000, scoped, tag = 'output window, operand 1, single buffered']
    #allocation7 [shape = 's32[1]{0}', space=sflag, size = 0x4, scoped, tag = 'scoped memory for tpu_custom_call.1']
    #allocation8 [shape = 'u8[8192]{0}', space=vmem, size = 0x2000, scoped, tag = 'output window, operand 2, single buffered']
    %9 = vsyncpa [#allocation3], 0
    %10 = vsyncpa [#allocation4], 0
    %11 = vsyncpa [#allocation7], 0
    // Predicated region
    $region2: #{tpu_custom_call.1} parent=1 // pred_check
      _
    $region3: #{tpu_custom_call.1} parent=1 // pred_check_branch
      %13 = sbr.rel (0) target = $region5
    $region4: #{tpu_custom_call.1} parent=1 // pred_region
      %s15 = ssub.s32 256, 256
      %16 = vsyncadd [#allocation3], %s15
      %s18 = sshll.u32 [#allocation2], 4
      %s19 = int_to_ptr.vmem [resolvable:$true] %s18
      %21 = dma.hbm_to_vmem [thread:$0]  %s0, 256, %s19, [#allocation3]
    $region5: #{tpu_custom_call.1} parent=1 // pred_fallthru
      _
    // Predicated region
    $region6: #{tpu_custom_call.1} parent=1 // pred_check
      _
    $region7: #{tpu_custom_call.1} parent=1 // pred_check_branch
      %23 = sbr.rel (0) target = $region9
    $region8: #{tpu_custom_call.1} parent=1 // pred_region
      %24 = dma.done [#allocation3], 256
    $region9: #{tpu_custom_call.1} parent=1 // pred_fallthru
      _
    %v25 = vld [vmem:[#allocation2] sm:$0x77]
    %v26 = vld [vmem:[#allocation2 + $0x8] sm:$0x77]
    %v27 = vmul.f32 %v25, 255.0
    %v28 = vmul.f32 %v26, 255.0
    %v29 = vfloor.f32 %v27
    %v30 = vfloor.f32 %v28
    %v31 = vmul.f32 %v29, 0.13880908
    %v32 = vmul.f32 %v30, 0.13880908
    %33 = vst [vmem:[#allocation5] sm:$0x77] %v31
    %34 = vst [vmem:[#allocation5 + $0x8] sm:$0x77] %v32
    %v35 = vmul.f32 %v29, 0.19925672
    %v36 = vmul.f32 %v30, 0.19925672
    %37 = vst [vmem:[#allocation6] sm:$0x77] %v35
    %38 = vst [vmem:[#allocation6 + $0x8] sm:$0x77] %v36
    %v39 = vmul.f32 %v29, 0.1817793
    %v40 = vmul.f32 %v30, 0.1817793
    %41 = vst [vmem:[#allocation8] sm:$0x77] %v39
    %42 = vst [vmem:[#allocation8 + $0x8] sm:$0x77] %v40
    // Predicated region
    $region10: #{tpu_custom_call.1} parent=1 // pred_check
      _
    $region11: #{tpu_custom_call.1} parent=1 // pred_check_branch
      %44 = sbr.rel (0) target = $region13
    $region12: #{tpu_custom_call.1} parent=1 // pred_region
      %s46 = ssub.s32 256, 256
      %47 = vsyncadd [#allocation4], %s46
      %s49 = sshll.u32 [#allocation5], 4
      %s50 = int_to_ptr.vmem [resolvable:$true] %s49
      %52 = dma.vmem_to_hbm [thread:$0]  %s50, 256, %s1, [#allocation4]
    $region13: #{tpu_custom_call.1} parent=1 // pred_fallthru
      _
    // Predicated region
    $region14: #{tpu_custom_call.1} parent=1 // pred_check
      _
    $region15: #{tpu_custom_call.1} parent=1 // pred_check_branch
      %54 = sbr.rel (0) target = $region17
    $region16: #{tpu_custom_call.1} parent=1 // pred_region
      %s56 = ssub.s32 256, 256
      %57 = vsyncadd [#allocation7], %s56
      %s59 = sshll.u32 [#allocation6], 4
      %s60 = int_to_ptr.vmem [resolvable:$true] %s59
      %62 = dma.vmem_to_hbm [thread:$0]  %s60, 256, %s2, [#allocation7]
    $region17: #{tpu_custom_call.1} parent=1 // pred_fallthru
      _
    // Predicated region
    $region18: #{tpu_custom_call.1} parent=1 // pred_check
      _
    $region19: #{tpu_custom_call.1} parent=1 // pred_check_branch
      %64 = sbr.rel (0) target = $region21
    $region20: #{tpu_custom_call.1} parent=1 // pred_region
      %s66 = ssub.s32 256, 256
      %67 = vsyncadd [#allocation7], %s66
      %s69 = sshll.u32 [#allocation8], 4
      %s70 = int_to_ptr.vmem [resolvable:$true] %s69
      %72 = dma.vmem_to_hbm [thread:$0]  %s70, 256, %s3, [#allocation7]
    $region21: #{tpu_custom_call.1} parent=1 // pred_fallthru
      _
    // Predicated region
    $region22: #{tpu_custom_call.1} parent=1 // pred_check
      _
    $region23: #{tpu_custom_call.1} parent=1 // pred_check_branch
      %74 = sbr.rel (0) target = $region25
    $region24: #{tpu_custom_call.1} parent=1 // pred_region
      %75 = dma.done [#allocation4], 256
    $region25: #{tpu_custom_call.1} parent=1 // pred_fallthru
      _
    // Predicated region
    $region26: #{tpu_custom_call.1} parent=1 // pred_check
      _
    $region27: #{tpu_custom_call.1} parent=1 // pred_check_branch
      %77 = sbr.rel (0) target = $region29
    $region28: #{tpu_custom_call.1} parent=1 // pred_region
      %78 = dma.done [#allocation7], 256
    $region29: #{tpu_custom_call.1} parent=1 // pred_fallthru
      _
    // Predicated region
    $region30: #{tpu_custom_call.1} parent=1 // pred_check
      _
    $region31: #{tpu_custom_call.1} parent=1 // pred_check_branch
      %80 = sbr.rel (0) target = $region33
    $region32: #{tpu_custom_call.1} parent=1 // pred_region
      %81 = dma.done [#allocation7], 256
    $region33: #{tpu_custom_call.1} parent=1 // pred_fallthru
      _
    %82 = vsyncpa [#allocation3], 1
    %83 = vsyncpa [#allocation4], 1
    %84 = vsyncpa [#allocation7], 1

</llo_original>
